<compile_context>
chip_gen: v7x
topology: tpu7x:2x2x1
jax: 0.10.0
libtpu: 0.0.40
codegen_flags: <defaults>
</compile_context>

<pallas_src>
import functools

import jax
import jax.numpy as jnp
from jax.experimental import pallas as pl
from jax.experimental.pallas import tpu as pltpu


def _cdiv(a, b):
    return -(-a // b)


def _round_up(a, b):
    return _cdiv(a, b) * b


# ---------------------------------------------------------------------------
# Kernels (transposed layout: activations are (channels, TILE_M))
# ---------------------------------------------------------------------------
def _fused_affine_kernel(x_ref, w_ref, b_ref, y_ref):
    # Single MXU matmul: y = W_fused @ x + b_fused  (f32 accumulate, cast at store)
    y = jnp.dot(w_ref[...], x_ref[...], preferred_element_type=jnp.float32) + b_ref[...]
    y_ref[...] = y.astype(y_ref.dtype)


def _chain_kernel(x_ref, wd_ref, bd_ref, wab_ref, bab_ref, wy_ref, by_ref, y_ref):
    # Fallback 3-matmul chain (kept for when a nonlinearity is inserted between stages).
    x = x_ref[...].astype(jnp.float32)
    h = jnp.dot(wd_ref[...], x, preferred_element_type=jnp.float32) + bd_ref[...]
    ab = jnp.dot(wab_ref[...], h, preferred_element_type=jnp.float32) + bab_ref[...]
    y = jnp.dot(wy_ref[...], ab, preferred_element_type=jnp.float32) + by_ref[...]
    y_ref[...] = y.astype(y_ref.dtype)


# ---------------------------------------------------------------------------
# Wrapper: NCHW glue + pallas_call
# ---------------------------------------------------------------------------
def parallel_connection_forward(x, params, *, compute_dtype=jnp.bfloat16,
                                tile_m_target=32768, fuse_chain=True):
    """x: [N, C_in, H, W]. Returns [y1, y2], each [N, C_out, H, W] in x.dtype."""
    (Wd, bd, Wa, ba, Wb, bb, Wu1, bu1, Wu2, bu2) = params
    N, C_in, H, W = x.shape
    C_mid = Wd.shape[0]
    C_out = Wu1.shape[1]
    Ho, Wo = H // 2, W // 2
    M = N * Ho * Wo
    K_in = C_in * 4
    K_out = C_out * 4
    R = 2 * K_out                                     # fused output rows (both branches)

    act_dtype = jnp.dtype(compute_dtype)
    sub = 16 if act_dtype.itemsize < 4 else 8         # sublane packing granule
    K_in_p = _round_up(K_in, sub)
    R_p = _round_up(R, sub)

    # --- weights/biases in "left-multiply" (transposed-activation) layout, f32 ----
    f32 = jnp.float32
    wd_k = Wd.reshape(C_mid, K_in).astype(f32)                      # (C_mid, C_in*4)
    wab_k = jnp.concatenate([Wa, Wb], axis=0).astype(f32)           # (2*C_mid, C_mid)
    w1t = Wu1.reshape(C_mid, K_out).T.astype(f32)                   # (C_out*4, C_mid)
    w2t = Wu2.reshape(C_mid, K_out).T.astype(f32)
    zero = jnp.zeros_like(w1t)
    wy_k = jnp.concatenate(                                         # block-diag (R, 2*C_mid)
        [jnp.concatenate([w1t, zero], axis=1),
         jnp.concatenate([zero, w2t], axis=1)], axis=0)
    bd_c = bd.astype(f32)[:, None]                                  # (C_mid, 1)
    bab_c = jnp.concatenate([ba, bb]).astype(f32)[:, None]          # (2*C_mid, 1)
    by_c = jnp.concatenate([jnp.repeat(bu1, 4),
                            jnp.repeat(bu2, 4)]).astype(f32)[:, None]   # (R, 1)

    # --- glue: space-to-depth directly in transposed (K, M) layout; cast to the
    # HBM compute dtype in the same XLA fusion (halves the glue write + kernel read).
    # rows = (c, d, e), lanes = (n, i, j):  x_t[(c,d,e),(n,i,j)] = x[n,c,2i+d,2j+e]
    x_t = (x.reshape(N, C_in, Ho, 2, Wo, 2)
            .transpose(1, 3, 5, 0, 2, 4)
            .reshape(K_in, M)
            .astype(act_dtype))
    if K_in_p != K_in:
        x_t = jnp.pad(x_t, ((0, K_in_p - K_in), (0, 0)))

    # --- tile selection: minimize lane padding, keep >=2 grid steps for v7x megacore
    min_steps = 2 if M >= 256 else 1
    n_tiles = max(_cdiv(M, tile_m_target), min_steps)
    tile_m = _round_up(_cdiv(M, n_tiles), 128)
    m_pad = n_tiles * tile_m
    if m_pad != M:
        x_t = jnp.pad(x_t, ((0, 0), (0, m_pad - M)))

    resident = lambda a: pl.BlockSpec(a.shape, lambda i: (0, 0))    # VMEM-resident params

    if fuse_chain:
        # No nonlinearity anywhere in the container -> collapse the chain into one
        # affine map; precompute the tiny fused weight/bias on the host side of the call.
        w_fused = wy_k @ (wab_k @ wd_k)                             # (R, K_in)
        b_fused = wy_k @ (wab_k @ bd_c + bab_c) + by_c              # (R, 1), kept f32
        if K_in_p != K_in:
            w_fused = jnp.pad(w_fused, ((0, 0), (0, K_in_p - K_in)))
        if R_p != R:
            w_fused = jnp.pad(w_fused, ((0, R_p - R), (0, 0)))
            b_fused = jnp.pad(b_fused, ((0, R_p - R), (0, 0)))
        w_k = w_fused.astype(act_dtype)
        kernel = _fused_affine_kernel
        operands = (x_t, w_k, b_fused)
        in_specs = [pl.BlockSpec((K_in_p, tile_m), lambda i: (0, i)),
                    resident(w_k), resident(b_fused)]
    else:
        if K_in_p != K_in:
            wd_k = jnp.pad(wd_k, ((0, 0), (0, K_in_p - K_in)))
        if R_p != R:
            wy_k = jnp.pad(wy_k, ((0, R_p - R), (0, 0)))
            by_c = jnp.pad(by_c, ((0, R_p - R), (0, 0)))
        kernel = _chain_kernel
        operands = (x_t, wd_k, bd_c, wab_k, bab_c, wy_k, by_c)
        in_specs = [pl.BlockSpec((K_in_p, tile_m), lambda i: (0, i))] + \
                   [resident(a) for a in operands[1:]]

    # VMEM budget: never below the 32 MiB default, never above 48 MiB (safe on v7x's
    # 64 MiB physical VMEM; plenty of headroom on v5e/v6e's 128 MiB).
    tile_bytes = (K_in_p + R_p) * tile_m * act_dtype.itemsize
    vmem_limit = int(min(48 << 20, max(4 * tile_bytes + (4 << 20), 32 << 20)))

    y_t = pl.pallas_call(
        kernel,
        out_shape=jax.ShapeDtypeStruct((R_p, m_pad), act_dtype),
        grid=(n_tiles,),
        in_specs=in_specs,
        out_specs=pl.BlockSpec((R_p, tile_m), lambda i: (0, i)),
        compiler_params=pltpu.CompilerParams(
            dimension_semantics=("parallel",),      # M tiles independent -> megacore on v7x
            vmem_limit_bytes=vmem_limit),
    )(*operands)

    y_t = y_t[:R, :M].astype(x.dtype)

    # --- glue: depth-to-space back to NCHW --------------------------------------
    def d2s(y_branch):   # (C_out*4, M) -> (N, C_out, H, W)
        return (y_branch.reshape(C_out, 2, 2, N, Ho, Wo)
                        .transpose(3, 0, 4, 1, 5, 2)
                        .reshape(N, C_out, H, W))

    return [d2s(y_t[:K_out]), d2s(y_t[K_out:])]


# ---------------------------------------------------------------------------
# Pure-JAX reference implementing the PyTorch conv definitions directly
# ---------------------------------------------------------------------------
def reference_forward(x, params):
    (Wd, bd, Wa, ba, Wb, bb, Wu1, bu1, Wu2, bu2) = params
    N, C_in, H, W = x.shape
    Ho, Wo = H // 2, W // 2
    xp = x.reshape(N, C_in, Ho, 2, Wo, 2)                       # n c i d j e
    h = jnp.einsum('ncidje,ocde->noij', xp, Wd) + bd[None, :, None, None]
    a = jnp.einsum('ncij,oc->noij', h, Wa) + ba[None, :, None, None]
    b = jnp.einsum('ncij,oc->noij', h, Wb) + bb[None, :, None, None]

    def up(z, Wu, bu):
        y = jnp.einsum('ncij,code->noidje', z, Wu)
        y = y.reshape(N, Wu.shape[1], H, W)
        return y + bu[None, :, None, None]

    return [up(a, Wu1, bu1), up(b, Wu2, bu2)]


if __name__ == "__main__":
    N, C_in, H, W = 2, 4, 16, 16
    C_mid, C_out = 8, 4

    key = jax.random.PRNGKey(0)
    kx, kwd, kbd, kwa, kba, kwb, kbb, kw1, kb1, kw2, kb2 = jax.random.split(key, 11)

    x = jax.random.normal(kx, (N, C_in, H, W), dtype=jnp.float32)

    params = (
        jax.random.normal(kwd, (C_mid, C_in, 2, 2), jnp.float32) * 0.1,   # down conv weight
        jax.random.normal(kbd, (C_mid,), jnp.float32) * 0.1,              # down conv bias
        jax.random.normal(kwa, (C_mid, C_mid), jnp.float32) * 0.1,        # conn branch-a 1x1
        jax.random.normal(kba, (C_mid,), jnp.float32) * 0.1,
        jax.random.normal(kwb, (C_mid, C_mid), jnp.float32) * 0.1,        # conn branch-b 1x1
        jax.random.normal(kbb, (C_mid,), jnp.float32) * 0.1,
        jax.random.normal(kw1, (C_mid, C_out, 2, 2), jnp.float32) * 0.1,  # up1 convT weight
        jax.random.normal(kb1, (C_out,), jnp.float32) * 0.1,
        jax.random.normal(kw2, (C_mid, C_out, 2, 2), jnp.float32) * 0.1,  # up2 convT weight
        jax.random.normal(kb2, (C_out,), jnp.float32) * 0.1,
    )

    r1, r2 = reference_forward(x, params)

    # f32 path (fused single-matmul kernel): tight check against the f32 reference.
    fwd_f32 = jax.jit(functools.partial(parallel_connection_forward,
                                        compute_dtype=jnp.float32))
    y1, y2 = fwd_f32(x, params)
    jax.block_until_ready(y1); jax.block_until_ready(y2)
    assert y1.shape == (N, C_out, H, W) and y2.shape == (N, C_out, H, W)
    assert jnp.allclose(y1, r1, atol=1e-4, rtol=1e-4)
    assert jnp.allclose(y2, r2, atol=1e-4, rtol=1e-4)

    # Default deployment path: bf16 activations at the HBM boundary (looser tolerance).
    fwd_bf16 = jax.jit(parallel_connection_forward)
    z1, z2 = fwd_bf16(x, params)
    jax.block_until_ready(z1); jax.block_until_ready(z2)
    assert jnp.allclose(z1, r1, atol=2e-2, rtol=2e-2)
    assert jnp.allclose(z2, r2, atol=2e-2, rtol=2e-2)

    # 3-matmul fallback path (used if a nonlinearity is later inserted between stages).
    fwd_chain = jax.jit(functools.partial(parallel_connection_forward,
                                          compute_dtype=jnp.float32, fuse_chain=False))
    c1, c2 = fwd_chain(x, params)
    jax.block_until_ready(c1); jax.block_until_ready(c2)
    assert jnp.allclose(c1, r1, atol=1e-4, rtol=1e-4)
    assert jnp.allclose(c2, r2, atol=1e-4, rtol=1e-4)

    print("KERNEL_OK")
</pallas_src>

<mosaic_0001>
module attributes {stable_mosaic.version = 11 : i64} {
  func.func @_fused_affine_kernel(%arg0: i32, %arg1: memref<16x128xf32, #tpu.memory_space<vmem>>, %arg2: memref<32x16xf32, #tpu.memory_space<vmem>>, %arg3: memref<32x1xf32, #tpu.memory_space<vmem>>, %arg4: memref<32x128xf32, #tpu.memory_space<vmem>>) attributes {dimension_semantics = [#tpu.dimension_semantics<parallel>], iteration_bounds = array<i64: 1>, scalar_prefetch = 0 : i64, scratch_operands = 0 : i64, tpu.core_type = #tpu.core_type<tc>, window_params = [{transform_indices = @transform_0, window_bounds = array<i64: 16, 128>}, {pipeline_mode = #tpu.pipeline_mode<synchronous>, transform_indices = @transform_1, window_bounds = array<i64: 32, 16>}, {pipeline_mode = #tpu.pipeline_mode<synchronous>, transform_indices = @transform_2, window_bounds = array<i64: 32, 1>}, {transform_indices = @transform_3, window_bounds = array<i64: 32, 128>}]} {
    %c0 = arith.constant 0 : index
    %c0_0 = arith.constant 0 : index
    %0 = vector.load %arg2[%c0, %c0_0] : memref<32x16xf32, #tpu.memory_space<vmem>>, vector<32x16xf32>
    %c0_1 = arith.constant 0 : index
    %c0_2 = arith.constant 0 : index
    %1 = vector.load %arg1[%c0_1, %c0_2] : memref<16x128xf32, #tpu.memory_space<vmem>>, vector<16x128xf32>
    %cst = arith.constant dense<0.000000e+00> : vector<32x128xf32>
    %2 = tpu.matmul %0, %1, %cst {dimension_numbers = #tpu.dot_dimension_numbers<[1], [0], [0], [1], [0, 0, 1, 1], [], []>} : vector<32x16xf32>, vector<16x128xf32>, vector<32x128xf32> -> vector<32x128xf32>
    %c0_3 = arith.constant 0 : index
    %c0_4 = arith.constant 0 : index
    %3 = vector.load %arg3[%c0_3, %c0_4] : memref<32x1xf32, #tpu.memory_space<vmem>>, vector<32x1xf32>
    %4 = vector.broadcast %3 : vector<32x1xf32> to vector<32x128xf32>
    %5 = arith.addf %2, %4 : vector<32x128xf32>
    %c0_5 = arith.constant 0 : index
    %c0_6 = arith.constant 0 : index
    %6 = vector.load %arg4[%c0_5, %c0_6] : memref<32x128xf32, #tpu.memory_space<vmem>>, vector<32x128xf32>
    tpu.vector_store %arg4[%c0_5, %c0_6], %5 {strides = array<i32>} : memref<32x128xf32, #tpu.memory_space<vmem>>, vector<32x128xf32>,
    return
  }
  func.func @transform_0(%arg0: i32) -> (i32, i32) {
    %c0_i32 = arith.constant 0 : i32
    %c0_i32_0 = arith.constant 0 : i32
    return %c0_i32, %arg0 : i32, i32
  }
  func.func @transform_1(%arg0: i32) -> (i32, i32) {
    %c0_i32 = arith.constant 0 : i32
    %c0_i32_0 = arith.constant 0 : i32
    %c0_i32_1 = arith.constant 0 : i32
    return %c0_i32, %c0_i32_0 : i32, i32
  }
  func.func @transform_2(%arg0: i32) -> (i32, i32) {
    %c0_i32 = arith.constant 0 : i32
    %c0_i32_0 = arith.constant 0 : i32
    %c0_i32_1 = arith.constant 0 : i32
    return %c0_i32, %c0_i32_0 : i32, i32
  }
  func.func @transform_3(%arg0: i32) -> (i32, i32) {
    %c0_i32 = arith.constant 0 : i32
    %c0_i32_0 = arith.constant 0 : i32
    return %c0_i32, %arg0 : i32, i32
  }
}

</mosaic_0001>

<llo_original>
// kernel: parallel_connection_forward.1
$region0: #{parallel_connection_forward.1}
  #allocation0 [shape = 'u32[]', space=smem, size = 0x4, offset = 0x4, fixed_abs, tag = 'smem constant byte address 0x4 - core index']
  #allocation1 [shape = 'u32[144,128]{1,0:T(1,128)}', space=vmem, size = 0x12000, scoped, tag = 'internal scratch']
  %s0 = inlined_call_operand.vmem [shape: f32[16,128], index: 0, kind: input, shape index: {}]
  %s1 = inlined_call_operand.vmem [shape: f32[32,16], index: 1, kind: input, shape index: {}]
  %s2 = inlined_call_operand.vmem [shape: f32[32,1], index: 2, kind: input, shape index: {}]
  %s3 = inlined_call_operand.vmem [shape: f32[32,128], index: 3, kind: output, shape index: {}]
  %s4 = sld [smem:[#allocation0]]
  $region22: #{parallel_connection_forward.1} parent=0
    _
  %s6 = ssub.s32 1, %s4
  %s7 = scalar_select 0, %s6, %s4
  // Predicated region
  $region2: #{parallel_connection_forward.1} parent=0 // pred_check
    _
  $region3: #{parallel_connection_forward.1} parent=0 // pred_check_branch
    %9 = sbr.rel (0) target = $region5
  $region4: #{parallel_connection_forward.1} parent=0 // pred_region
    _
  $region5: #{parallel_connection_forward.1} parent=0 // pred_fallthru
    _
  // Predicated region
  $region6: #{parallel_connection_forward.1} parent=0 // pred_check
    _
  $region7: #{parallel_connection_forward.1} parent=0 // pred_check_branch
    %11 = sbr.rel (0) target = $region9
  $region8: #{parallel_connection_forward.1} parent=0 // pred_region
    _
  $region9: #{parallel_connection_forward.1} parent=0 // pred_fallthru
    _
  // Predicated region
  $region10: #{parallel_connection_forward.1} parent=0 // pred_check
    _
  $region11: #{parallel_connection_forward.1} parent=0 // pred_check_branch
    %13 = sbr.rel (0) target = $region13
  $region12: #{parallel_connection_forward.1} parent=0 // pred_region
    _
  $region13: #{parallel_connection_forward.1} parent=0 // pred_fallthru
    _
  %v14 = vld [vmem:[%s1] sm:$0xff]
  %v15 = vld [vmem:[%s1 + $0x8] sm:$0xff]
  %v16 = vld [vmem:[%s1 + $0x10] sm:$0xff]
  %v17 = vld [vmem:[%s1 + $0x18] sm:$0xff]
  %v18 = vld [vmem:[%s0] sm:$0xff]
  %v19 = vld [vmem:[%s0 + $0x8] sm:$0xff]
  %v20 = vld [vmem:[%s2] sm:$0xff]
  %v21 = vld [vmem:[%s2 + $0x8] sm:$0xff]
  %v22 = vld [vmem:[%s2 + $0x10] sm:$0xff]
  %v23 = vld [vmem:[%s2 + $0x18] sm:$0xff]
  %25 = vset.pattern.permute.xlu0 0
  %26 = vperm.xlu0 %25, %v20
  %v27 = vpop.permute.xlu0 %26
  %30 = vset.pattern.permute.xlu0 0
  %31 = vperm.xlu0 %30, %v21
  %v32 = vpop.permute.xlu0 %31
  %35 = vset.pattern.permute.xlu0 0
  %36 = vperm.xlu0 %35, %v22
  %v37 = vpop.permute.xlu0 %36
  %40 = vset.pattern.permute.xlu0 0
  %41 = vperm.xlu0 %40, %v23
  %v42 = vpop.permute.xlu0 %41
  %vm44 = vcmask 130048
  %v46 = vsel %vm44, %v14, 0
  %v49 = vsel %vm44, %v15, 0
  %v52 = vsel %vm44, %v16, 0
  %v55 = vsel %vm44, %v17, 0
  %57 = vmatprep.subr.mxu0 0.0
  %58 = vmatpush1.msra.mxu0 %v18
  %59 = vmatprep.subr.mxu0 0.0
  %60 = vmatpush1.msra.mxu0 %v19
  %61 = vmatprep.subr.mxu0 0.0
  %62 = vmatpush1.msra.mxu0 0.0
  %63 = vmatprep.subr.mxu0 0.0
  %64 = vmatpush1.msra.mxu0 0.0
  %65 = vmatprep.subr.mxu0 0.0
  %66 = vmatpush1.msra.mxu0 0.0
  %67 = vmatprep.subr.mxu0 0.0
  %68 = vmatpush1.msra.mxu0 0.0
  %69 = vmatprep.subr.mxu0 0.0
  %70 = vmatpush1.msra.mxu0 0.0
  %71 = vmatprep.subr.mxu0 0.0
  %72 = vmatpush1.msra.mxu0 0.0
  %73 = vmatprep.subr.mxu0 0.0
  %74 = vmatpush1.msra.mxu0 0.0
  %75 = vmatprep.subr.mxu0 0.0
  %76 = vmatpush1.msra.mxu0 0.0
  %77 = vmatprep.subr.mxu0 0.0
  %78 = vmatpush1.msra.mxu0 0.0
  %79 = vmatprep.subr.mxu0 0.0
  %80 = vmatpush1.msra.mxu0 0.0
  %81 = vmatprep.subr.mxu0 0.0
  %82 = vmatpush1.msra.mxu0 0.0
  %83 = vmatprep.subr.mxu0 0.0
  %84 = vmatpush1.msra.mxu0 0.0
  %85 = vmatprep.subr.mxu0 0.0
  %86 = vmatpush1.msra.mxu0 0.0
  %87 = vmatprep.subr.mxu0 0.0
  %88 = vmatpush1.msra.mxu0 0.0
  %89 = vmatprep.subr.mxu0 0.0
  %90 = vmatpush1.msra.mxu0 0.0
  %91 = vmatprep.subr.mxu0 0.0
  %92 = vmatpush1.msra.mxu0 0.0
  %93 = vmatprep.subr.mxu0 0.0
  %94 = vmatpush1.msra.mxu0 0.0
  %95 = vmatprep.subr.mxu0 0.0
  %96 = vmatpush1.msra.mxu0 0.0
  %97 = vmatprep.subr.mxu0 0.0
  %98 = vmatpush1.msra.mxu0 0.0
  %99 = vmatprep.subr.mxu0 0.0
  %100 = vmatpush1.msra.mxu0 0.0
  %101 = vmatprep.subr.mxu0 0.0
  %102 = vmatpush1.msra.mxu0 0.0
  %103 = vmatprep.subr.mxu0 0.0
  %104 = vmatpush1.msra.mxu0 0.0
  %105 = vmatprep.subr.mxu0 0.0
  %106 = vmatpush1.msra.mxu0 0.0
  %107 = vmatprep.subr.mxu0 0.0
  %108 = vmatpush1.msra.mxu0 0.0
  %109 = vmatprep.subr.mxu0 0.0
  %110 = vmatpush1.msra.mxu0 0.0
  %111 = vmatprep.subr.mxu0 0.0
  %112 = vmatpush1.msra.mxu0 0.0
  %113 = vmatprep.subr.mxu0 0.0
  %114 = vmatpush1.msra.mxu0 0.0
  %115 = vmatprep.subr.mxu0 0.0
  %116 = vmatpush1.msra.mxu0 0.0
  %117 = vmatprep.subr.mxu0 0.0
  %118 = vmatpush1.msra.mxu0 0.0
  %119 = vmatprep.subr.mxu0 0.0
  %120 = vmatpush1.msra.mxu0 0.0
  %121 = vmatprep.mubr.f32.mxu0 0.0
  %122 = vmatmul.mubr.f32.gmra.mrb[0].mxu0 %v46
  %v123 = vpop.f32.mrb[0].mxu0
  %v124 = vadd.f32 %v27, %v123
  %v125 = vpop.f32.mrb[0].mxu0
  %126 = vmatprep.mubr.f32.mxu0 0.0
  %127 = vmatmul.mubr.f32.gmra.mrb[0].mxu0 %v49
  %v128 = vpop.f32.mrb[0].mxu0
  %v129 = vadd.f32 %v32, %v128
  %v130 = vpop.f32.mrb[0].mxu0
  %131 = vmatprep.mubr.f32.mxu0 0.0
  %132 = vmatmul.mubr.f32.gmra.mrb[0].mxu0 %v52
  %v133 = vpop.f32.mrb[0].mxu0
  %v134 = vadd.f32 %v37, %v133
  %v135 = vpop.f32.mrb[0].mxu0
  %136 = vmatprep.mubr.f32.mxu0 0.0
  %137 = vmatmul.mubr.f32.gmra.mrb[0].mxu0 %v55
  %v138 = vpop.f32.mrb[0].mxu0
  %v139 = vadd.f32 %v42, %v138
  %v140 = vpop.f32.mrb[0].mxu0
  %141 = vdwg.mxu0
  %142 = vst [vmem:[%s3] sm:$0xff] %v124
  %143 = vst [vmem:[%s3 + $0x8] sm:$0xff] %v129
  %144 = vst [vmem:[%s3 + $0x10] sm:$0xff] %v134
  %145 = vst [vmem:[%s3 + $0x18] sm:$0xff] %v139
  // Predicated region
  $region14: #{parallel_connection_forward.1} parent=0 // pred_check
    _
  $region15: #{parallel_connection_forward.1} parent=0 // pred_check_branch
    %147 = sbr.rel (0) target = $region17
  $region16: #{parallel_connection_forward.1} parent=0 // pred_region
    _
  $region17: #{parallel_connection_forward.1} parent=0 // pred_fallthru
    _
  // Predicated region
  $region18: #{parallel_connection_forward.1} parent=0 // pred_check
    _
  $region19: #{parallel_connection_forward.1} parent=0 // pred_check_branch
    %149 = sbr.rel (0) target = $region21
  $region20: #{parallel_connection_forward.1} parent=0 // pred_region
    _
  $region21: #{parallel_connection_forward.1} parent=0 // pred_fallthru
    _

</llo_original>
